<compile_context>
chip_gen: v7x
topology: tpu7x:2x2x1
jax: 0.10.0
libtpu: 0.0.40
codegen_flags: <defaults>
</compile_context>

<pallas_src>
import jax
import jax.numpy as jnp
from jax import lax
from jax.experimental import pallas as pl
from jax.experimental.pallas import tpu as pltpu

HIDDEN = 128
IN_DIM = 3


def _round_up(x, m):
    return (x + m - 1) // m * m


def critic_kernel(xT_ref, w1_ref, b1_ref, w2_ref, b2_ref, o_ref):
    # xT_ref: (3, TILE_B)      batch in lanes
    # w1_ref: (128, 3)         PyTorch fc.weight layout
    # b1_ref: (128, 1)
    # w2_ref: (128, 1)         v.weight^T
    # b2_ref: (1, 1) in SMEM
    # o_ref:  (1, TILE_B)      lane-dense output block
    #
    # Layer 1 on the MXU (idle slot): (128,3)x(3,tile_b) -> (128, tile_b),
    # hidden-in-sublanes / batch-in-lanes. HIGHEST precision keeps full f32
    # accuracy (matches the PyTorch f32 path).
    h = jnp.dot(w1_ref[...], xT_ref[...],
                preferred_element_type=jnp.float32,
                precision=lax.Precision.HIGHEST)
    h = jnp.maximum(h + b1_ref[...], 0.0)          # bias + ReLU on the VPU

    # Layer 2: per-column weighted sum over the 128 hidden sublanes ->
    # 16-vreg VPU multiply/add chain + one 8-wide sublane reduce (XLU).
    v = jnp.sum(h * w2_ref[...], axis=0, keepdims=True) + b2_ref[0, 0]
    o_ref[...] = v.astype(o_ref.dtype)             # (1, tile_b), unmasked store


def critic_forward(x, w1, b1, w2, b2, *, tile_b=None):
    """x: (B, 3) f32. Returns state_value: (B, 1) f32.

    tile_b (multiple of 128) sizes the lane-dense batch tile. Default: half
    the 128-padded batch, capped at 1024 -- 1 tile for tiny batches, 2 even
    tiles for typical PPO batches (one per v7x TensorCore). The kernel is
    compute-bound, so tile size is chosen for grid-step overhead / TC
    balance, not for HBM bandwidth.
    """
    B, K = x.shape
    assert K == IN_DIM

    b_pad = _round_up(B, 128)
    if tile_b is None:
        tile_b = max(128, min(_round_up(pl.cdiv(b_pad, 2), 128), 1024))
    assert tile_b % 128 == 0
    b_pad = _round_up(b_pad, tile_b)   # every grid step stores a full tile
    n_tiles = b_pad // tile_b

    # Batch-in-lanes layout: (3, B_pad). The transpose/pad are tiny XLA ops
    # outside the (compute-bound) kernel hot path.
    xT = jnp.transpose(x)
    if b_pad != B:
        xT = jnp.pad(xT, ((0, 0), (0, b_pad - B)))

    out = pl.pallas_call(
        critic_kernel,
        out_shape=jax.ShapeDtypeStruct((1, b_pad), jnp.float32),
        grid=(n_tiles,),
        in_specs=[
            # Streamed input: one (3, TILE_B) slab per grid step.
            pl.BlockSpec((IN_DIM, tile_b), lambda i: (0, i)),
            # Weights / biases: constant index_map -> VMEM-resident.
            pl.BlockSpec((HIDDEN, IN_DIM), lambda i: (0, 0)),
            pl.BlockSpec((HIDDEN, 1), lambda i: (0, 0)),
            pl.BlockSpec((HIDDEN, 1), lambda i: (0, 0)),
            # b2 as an SMEM scalar (no (8,128)-padded VMEM tile).
            pl.BlockSpec(memory_space=pltpu.MemorySpace.SMEM),
        ],
        out_specs=pl.BlockSpec((1, tile_b), lambda i: (0, i)),
        compiler_params=pltpu.CompilerParams(
            dimension_semantics=("parallel",),   # megacore sharding on v7x
        ),
    )(xT, w1, b1, w2, b2)

    # Padded columns hold relu(b1)·w2+b2 garbage -- slice before any consumer.
    return out[0, :B].reshape(B, 1)


def init_params(key):
    """Deterministic init mimicking nn.Linear default (uniform +-1/sqrt(fan_in))."""
    k1, k2, k3, k4 = jax.random.split(key, 4)
    bound1 = 1.0 / jnp.sqrt(3.0)
    bound2 = 1.0 / jnp.sqrt(128.0)
    w1 = jax.random.uniform(k1, (HIDDEN, IN_DIM), jnp.float32, -bound1, bound1)  # fc.weight
    b1 = jax.random.uniform(k2, (HIDDEN, 1), jnp.float32, -bound1, bound1)       # fc.bias
    w2 = jax.random.uniform(k3, (HIDDEN, 1), jnp.float32, -bound2, bound2)       # v.weight^T
    b2 = jax.random.uniform(k4, (1, 1), jnp.float32, -bound2, bound2)            # v.bias
    return w1, b1, w2, b2


def _reference(x, w1, b1, w2, b2):
    hp = lax.Precision.HIGHEST
    h = jnp.maximum(jnp.dot(x, w1.T, precision=hp) + b1[:, 0], 0.0)
    return jnp.dot(h, w2, precision=hp) + b2[0, 0]


if __name__ == "__main__":
    key = jax.random.PRNGKey(0)
    kx, kp, kx2 = jax.random.split(key, 3)
    w1, b1, w2, b2 = init_params(kp)

    # Small shape consistent with the module (Pendulum-style obs dim 3).
    B = 8
    x = jax.random.normal(kx, (B, 3), jnp.float32)
    out = jax.block_until_ready(critic_forward(x, w1, b1, w2, b2))
    ref = _reference(x, w1, b1, w2, b2)
    assert out.shape == (B, 1)
    assert jnp.allclose(out, ref, atol=1e-4, rtol=1e-5)

    # Multi-tile path: B=700 -> padded 768, two even 384-wide tiles.
    B2 = 700
    x2 = jax.random.normal(kx2, (B2, 3), jnp.float32)
    out2 = jax.block_until_ready(critic_forward(x2, w1, b1, w2, b2))
    ref2 = _reference(x2, w1, b1, w2, b2)
    assert out2.shape == (B2, 1)
    assert jnp.allclose(out2, ref2, atol=1e-4, rtol=1e-5)

    print("KERNEL_OK")
</pallas_src>

<mosaic_0001>
module attributes {stable_mosaic.version = 11 : i64} {
  func.func @critic_kernel(%arg0: i32, %arg1: memref<3x128xf32, #tpu.memory_space<vmem>>, %arg2: memref<128x3xf32, #tpu.memory_space<vmem>>, %arg3: memref<128x1xf32, #tpu.memory_space<vmem>>, %arg4: memref<128x1xf32, #tpu.memory_space<vmem>>, %arg5: memref<1x1xf32, #tpu.memory_space<smem>>, %arg6: memref<1x128xf32, #tpu.memory_space<vmem>>) attributes {dimension_semantics = [#tpu.dimension_semantics<parallel>], iteration_bounds = array<i64: 1>, scalar_prefetch = 0 : i64, scratch_operands = 0 : i64, tpu.core_type = #tpu.core_type<tc>, window_params = [{transform_indices = @transform_0, window_bounds = array<i64: 3, 128>}, {pipeline_mode = #tpu.pipeline_mode<synchronous>, transform_indices = @transform_1, window_bounds = array<i64: 128, 3>}, {pipeline_mode = #tpu.pipeline_mode<synchronous>, transform_indices = @transform_2, window_bounds = array<i64: 128, 1>}, {pipeline_mode = #tpu.pipeline_mode<synchronous>, transform_indices = @transform_3, window_bounds = array<i64: 128, 1>}, {transform_indices = @transform_4, window_bounds = array<i64: 1, 1>}, {transform_indices = @transform_5, window_bounds = array<i64: 1, 128>}]} {
    %c0 = arith.constant 0 : index
    %c0_0 = arith.constant 0 : index
    %0 = vector.load %arg2[%c0, %c0_0] : memref<128x3xf32, #tpu.memory_space<vmem>>, vector<128x3xf32>
    %c0_1 = arith.constant 0 : index
    %c0_2 = arith.constant 0 : index
    %1 = vector.load %arg1[%c0_1, %c0_2] : memref<3x128xf32, #tpu.memory_space<vmem>>, vector<3x128xf32>
    %cst = arith.constant dense<0.000000e+00> : vector<128x128xf32>
    %2 = tpu.matmul %0, %1, %cst {dimension_numbers = #tpu.dot_dimension_numbers<[1], [0], [0], [1], [0, 0, 1, 1], [], []>, precision = #tpu.contract_precision<fp32>} : vector<128x3xf32>, vector<3x128xf32>, vector<128x128xf32> -> vector<128x128xf32>
    %c0_3 = arith.constant 0 : index
    %c0_4 = arith.constant 0 : index
    %3 = vector.load %arg3[%c0_3, %c0_4] : memref<128x1xf32, #tpu.memory_space<vmem>>, vector<128x1xf32>
    %4 = vector.broadcast %3 : vector<128x1xf32> to vector<128x128xf32>
    %5 = arith.addf %2, %4 : vector<128x128xf32>
    %cst_5 = arith.constant 0.000000e+00 : f32
    %6 = vector.broadcast %cst_5 : f32 to vector<128x128xf32>
    %7 = arith.maximumf %5, %6 : vector<128x128xf32>
    %c0_6 = arith.constant 0 : index
    %c0_7 = arith.constant 0 : index
    %8 = vector.load %arg4[%c0_6, %c0_7] : memref<128x1xf32, #tpu.memory_space<vmem>>, vector<128x1xf32>
    %9 = vector.broadcast %8 : vector<128x1xf32> to vector<128x128xf32>
    %10 = arith.mulf %7, %9 : vector<128x128xf32>
    %cst_8 = arith.constant dense<0.000000e+00> : vector<128xf32>
    %11 = vector.multi_reduction <add>, %10, %cst_8 [0] : vector<128x128xf32> to vector<128xf32>
    %12 = vector.shape_cast %11 : vector<128xf32> to vector<1x128xf32>
    %c0_9 = arith.constant 0 : index
    %c0_10 = arith.constant 0 : index
    %13 = memref.load %arg5[%c0_9, %c0_10] : memref<1x1xf32, #tpu.memory_space<smem>>
    %14 = vector.broadcast %13 : f32 to vector<1x128xf32>
    %15 = arith.addf %12, %14 : vector<1x128xf32>
    %c0_11 = arith.constant 0 : index
    %c0_12 = arith.constant 0 : index
    %16 = vector.load %arg6[%c0_11, %c0_12] : memref<1x128xf32, #tpu.memory_space<vmem>>, vector<1x128xf32>
    tpu.vector_store %arg6[%c0_11, %c0_12], %15 {strides = array<i32>} : memref<1x128xf32, #tpu.memory_space<vmem>>, vector<1x128xf32>,
    return
  }
  func.func @transform_0(%arg0: i32) -> (i32, i32) {
    %c0_i32 = arith.constant 0 : i32
    %c0_i32_0 = arith.constant 0 : i32
    return %c0_i32, %arg0 : i32, i32
  }
  func.func @transform_1(%arg0: i32) -> (i32, i32) {
    %c0_i32 = arith.constant 0 : i32
    %c0_i32_0 = arith.constant 0 : i32
    %c0_i32_1 = arith.constant 0 : i32
    return %c0_i32, %c0_i32_0 : i32, i32
  }
  func.func @transform_2(%arg0: i32) -> (i32, i32) {
    %c0_i32 = arith.constant 0 : i32
    %c0_i32_0 = arith.constant 0 : i32
    %c0_i32_1 = arith.constant 0 : i32
    return %c0_i32, %c0_i32_0 : i32, i32
  }
  func.func @transform_3(%arg0: i32) -> (i32, i32) {
    %c0_i32 = arith.constant 0 : i32
    %c0_i32_0 = arith.constant 0 : i32
    %c0_i32_1 = arith.constant 0 : i32
    return %c0_i32, %c0_i32_0 : i32, i32
  }
  func.func @transform_4(%arg0: i32) -> (i32, i32) {
    %c0_i32 = arith.constant 0 : i32
    %c0_i32_0 = arith.constant 0 : i32
    %c0_i32_1 = arith.constant 0 : i32
    return %c0_i32, %c0_i32_0 : i32, i32
  }
  func.func @transform_5(%arg0: i32) -> (i32, i32) {
    %c0_i32 = arith.constant 0 : i32
    %c0_i32_0 = arith.constant 0 : i32
    return %c0_i32, %arg0 : i32, i32
  }
}

</mosaic_0001>

<llo_original>
// kernel: tpu_custom_call.1
$region0: #{tpu_custom_call.1}
  #allocation0 [shape = 'u32[]', space=smem, size = 0x4, offset = 0x4, fixed_abs, tag = 'smem constant byte address 0x4 - core index']
  #allocation1 [shape = 'u32[144,128]{1,0:T(1,128)}', space=vmem, size = 0x12000, scoped, tag = 'internal scratch']
  #allocation2 [shape = 'f32[1,1]{1,0:T(1,128)S(6)}', space=smem, size = 0x200, scoped, tag = 'scoped memory for tpu_custom_call.1']
  %s0 = inlined_call_operand.vmem [shape: f32[3,128], index: 0, kind: input, shape index: {}]
  %s1 = inlined_call_operand.vmem [shape: f32[128,3], index: 1, kind: input, shape index: {}]
  %s2 = inlined_call_operand.vmem [shape: f32[128,1], index: 2, kind: input, shape index: {}]
  %s3 = inlined_call_operand.vmem [shape: f32[128,1], index: 3, kind: input, shape index: {}]
  %s4 = inlined_call_operand.<no memory space> [shape: f32[1,1], index: 4, kind: input, shape index: {}]
  %s5 = inlined_call_operand.hbm [shape: f32[1,128], index: 5, kind: output, shape index: {}]
  %s6 = sld [smem:[#allocation0]]
  $region30: #{tpu_custom_call.1} parent=0
    _
  %s8 = ssub.s32 1, %s6
  %s9 = scalar_select 0, %s8, %s6
  %10 = sst [smem:[#allocation2]] %s4
  $region1: #{tpu_custom_call.1} parent=0
    #allocation3 [shape = 'u8[512]{0}', space=vmem, size = 0x400, scoped, tag = 'output window, operand 0, single buffered']
    #allocation4 [shape = 's32[1]{0}', space=sflag, size = 0x4, scoped, tag = 'scoped memory for tpu_custom_call.1']
    %11 = vsyncpa [#allocation4], 0
    // Predicated region
    $region2: #{tpu_custom_call.1} parent=1 // pred_check
      _
    $region3: #{tpu_custom_call.1} parent=1 // pred_check_branch
      %13 = sbr.rel (0) target = $region5
    $region4: #{tpu_custom_call.1} parent=1 // pred_region
      _
    $region5: #{tpu_custom_call.1} parent=1 // pred_fallthru
      _
    // Predicated region
    $region6: #{tpu_custom_call.1} parent=1 // pred_check
      _
    $region7: #{tpu_custom_call.1} parent=1 // pred_check_branch
      %15 = sbr.rel (0) target = $region9
    $region8: #{tpu_custom_call.1} parent=1 // pred_region
      _
    $region9: #{tpu_custom_call.1} parent=1 // pred_fallthru
      _
    // Predicated region
    $region10: #{tpu_custom_call.1} parent=1 // pred_check
      _
    $region11: #{tpu_custom_call.1} parent=1 // pred_check_branch
      %17 = sbr.rel (0) target = $region13
    $region12: #{tpu_custom_call.1} parent=1 // pred_region
      _
    $region13: #{tpu_custom_call.1} parent=1 // pred_fallthru
      _
    // Predicated region
    $region14: #{tpu_custom_call.1} parent=1 // pred_check
      _
    $region15: #{tpu_custom_call.1} parent=1 // pred_check_branch
      %19 = sbr.rel (0) target = $region17
    $region16: #{tpu_custom_call.1} parent=1 // pred_region
      _
    $region17: #{tpu_custom_call.1} parent=1 // pred_fallthru
      _
    // Predicated region
    $region18: #{tpu_custom_call.1} parent=1 // pred_check
      _
    $region19: #{tpu_custom_call.1} parent=1 // pred_check_branch
      %21 = sbr.rel (0) target = $region21
    $region20: #{tpu_custom_call.1} parent=1 // pred_region
      _
    $region21: #{tpu_custom_call.1} parent=1 // pred_fallthru
      _
    %v22 = vld [vmem:[%s1] sm:$0xff]
    %v23 = vld [vmem:[%s1 + $0x8] sm:$0xff]
    %v24 = vld [vmem:[%s1 + $0x10] sm:$0xff]
    %v25 = vld [vmem:[%s1 + $0x18] sm:$0xff]
    %v26 = vld [vmem:[%s1 + $0x20] sm:$0xff]
    %v27 = vld [vmem:[%s1 + $0x28] sm:$0xff]
    %v28 = vld [vmem:[%s1 + $0x30] sm:$0xff]
    %v29 = vld [vmem:[%s1 + $0x38] sm:$0xff]
    %v30 = vld [vmem:[%s1 + $0x40] sm:$0xff]
    %v31 = vld [vmem:[%s1 + $0x48] sm:$0xff]
    %v32 = vld [vmem:[%s1 + $0x50] sm:$0xff]
    %v33 = vld [vmem:[%s1 + $0x58] sm:$0xff]
    %v34 = vld [vmem:[%s1 + $0x60] sm:$0xff]
    %v35 = vld [vmem:[%s1 + $0x68] sm:$0xff]
    %v36 = vld [vmem:[%s1 + $0x70] sm:$0xff]
    %v37 = vld [vmem:[%s1 + $0x78] sm:$0xff]
    %v38 = vld [vmem:[%s0] sm:$0x7]
    %v39 = vld [vmem:[%s2] sm:$0xff]
    %v40 = vld [vmem:[%s2 + $0x8] sm:$0xff]
    %v41 = vld [vmem:[%s2 + $0x10] sm:$0xff]
    %v42 = vld [vmem:[%s2 + $0x18] sm:$0xff]
    %v43 = vld [vmem:[%s2 + $0x20] sm:$0xff]
    %v44 = vld [vmem:[%s2 + $0x28] sm:$0xff]
    %v45 = vld [vmem:[%s2 + $0x30] sm:$0xff]
    %v46 = vld [vmem:[%s2 + $0x38] sm:$0xff]
    %v47 = vld [vmem:[%s2 + $0x40] sm:$0xff]
    %v48 = vld [vmem:[%s2 + $0x48] sm:$0xff]
    %v49 = vld [vmem:[%s2 + $0x50] sm:$0xff]
    %v50 = vld [vmem:[%s2 + $0x58] sm:$0xff]
    %v51 = vld [vmem:[%s2 + $0x60] sm:$0xff]
    %v52 = vld [vmem:[%s2 + $0x68] sm:$0xff]
    %v53 = vld [vmem:[%s2 + $0x70] sm:$0xff]
    %v54 = vld [vmem:[%s2 + $0x78] sm:$0xff]
    %56 = vset.pattern.permute.xlu0 0
    %57 = vperm.xlu0 %56, %v39
    %v58 = vpop.permute.xlu0 %57
    %61 = vset.pattern.permute.xlu0 0
    %62 = vperm.xlu0 %61, %v40
    %v63 = vpop.permute.xlu0 %62
    %66 = vset.pattern.permute.xlu0 0
    %67 = vperm.xlu0 %66, %v41
    %v68 = vpop.permute.xlu0 %67
    %71 = vset.pattern.permute.xlu0 0
    %72 = vperm.xlu0 %71, %v42
    %v73 = vpop.permute.xlu0 %72
    %76 = vset.pattern.permute.xlu0 0
    %77 = vperm.xlu0 %76, %v43
    %v78 = vpop.permute.xlu0 %77
    %81 = vset.pattern.permute.xlu0 0
    %82 = vperm.xlu0 %81, %v44
    %v83 = vpop.permute.xlu0 %82
    %86 = vset.pattern.permute.xlu0 0
    %87 = vperm.xlu0 %86, %v45
    %v88 = vpop.permute.xlu0 %87
    %91 = vset.pattern.permute.xlu0 0
    %92 = vperm.xlu0 %91, %v46
    %v93 = vpop.permute.xlu0 %92
    %96 = vset.pattern.permute.xlu0 0
    %97 = vperm.xlu0 %96, %v47
    %v98 = vpop.permute.xlu0 %97
    %101 = vset.pattern.permute.xlu0 0
    %102 = vperm.xlu0 %101, %v48
    %v103 = vpop.permute.xlu0 %102
    %106 = vset.pattern.permute.xlu0 0
    %107 = vperm.xlu0 %106, %v49
    %v108 = vpop.permute.xlu0 %107
    %111 = vset.pattern.permute.xlu0 0
    %112 = vperm.xlu0 %111, %v50
    %v113 = vpop.permute.xlu0 %112
    %116 = vset.pattern.permute.xlu0 0
    %117 = vperm.xlu0 %116, %v51
    %v118 = vpop.permute.xlu0 %117
    %121 = vset.pattern.permute.xlu0 0
    %122 = vperm.xlu0 %121, %v52
    %v123 = vpop.permute.xlu0 %122
    %126 = vset.pattern.permute.xlu0 0
    %127 = vperm.xlu0 %126, %v53
    %v128 = vpop.permute.xlu0 %127
    %131 = vset.pattern.permute.xlu0 0
    %132 = vperm.xlu0 %131, %v54
    %v133 = vpop.permute.xlu0 %132
    %vm135 = vcmask 23552
    %v137 = vsel %vm135, %v22, 0
    %v140 = vsel %vm135, %v23, 0
    %v143 = vsel %vm135, %v24, 0
    %v146 = vsel %vm135, %v25, 0
    %v149 = vsel %vm135, %v26, 0
    %v152 = vsel %vm135, %v27, 0
    %v155 = vsel %vm135, %v28, 0
    %v158 = vsel %vm135, %v29, 0
    %v161 = vsel %vm135, %v30, 0
    %v164 = vsel %vm135, %v31, 0
    %v167 = vsel %vm135, %v32, 0
    %v170 = vsel %vm135, %v33, 0
    %v173 = vsel %vm135, %v34, 0
    %v176 = vsel %vm135, %v35, 0
    %v179 = vsel %vm135, %v36, 0
    %v182 = vsel %vm135, %v37, 0
    %vm184 = vcmask 1042432
    %v186 = vsel %vm184, %v38, 0
    %188 = vmatprep.subr.mxu0 0.0
    %v189 = vand.u32 %v186, 4294901760
    %190 = vmatpush1.msra.mxu0 %v189
    %191 = vmatprep.subr.mxu0 0.0
    %192 = vmatpush1.msra.mxu0 0.0
    %193 = vmatprep.subr.mxu0 0.0
    %194 = vmatpush1.msra.mxu0 0.0
    %195 = vmatprep.subr.mxu0 0.0
    %196 = vmatpush1.msra.mxu0 0.0
    %197 = vmatprep.subr.mxu0 0.0
    %198 = vmatpush1.msra.mxu0 0.0
    %199 = vmatprep.subr.mxu0 0.0
    %200 = vmatpush1.msra.mxu0 0.0
    %201 = vmatprep.subr.mxu0 0.0
    %202 = vmatpush1.msra.mxu0 0.0
    %203 = vmatprep.subr.mxu0 0.0
    %204 = vmatpush1.msra.mxu0 0.0
    %205 = vmatprep.subr.mxu0 0.0
    %206 = vmatpush1.msra.mxu0 0.0
    %207 = vmatprep.subr.mxu0 0.0
    %208 = vmatpush1.msra.mxu0 0.0
    %209 = vmatprep.subr.mxu0 0.0
    %210 = vmatpush1.msra.mxu0 0.0
    %211 = vmatprep.subr.mxu0 0.0
    %212 = vmatpush1.msra.mxu0 0.0
    %213 = vmatprep.subr.mxu0 0.0
    %214 = vmatpush1.msra.mxu0 0.0
    %215 = vmatprep.subr.mxu0 0.0
    %216 = vmatpush1.msra.mxu0 0.0
    %217 = vmatprep.subr.mxu0 0.0
    %218 = vmatpush1.msra.mxu0 0.0
    %219 = vmatprep.subr.mxu0 0.0
    %220 = vmatpush1.msra.mxu0 0.0
    %221 = vmatprep.subr.mxu0 0.0
    %222 = vmatpush1.msra.mxu0 0.0
    %223 = vmatprep.subr.mxu0 0.0
    %224 = vmatpush1.msra.mxu0 0.0
    %225 = vmatprep.subr.mxu0 0.0
    %226 = vmatpush1.msra.mxu0 0.0
    %227 = vmatprep.subr.mxu0 0.0
    %228 = vmatpush1.msra.mxu0 0.0
    %229 = vmatprep.subr.mxu0 0.0
    %230 = vmatpush1.msra.mxu0 0.0
    %231 = vmatprep.subr.mxu0 0.0
    %232 = vmatpush1.msra.mxu0 0.0
    %233 = vmatprep.subr.mxu0 0.0
    %234 = vmatpush1.msra.mxu0 0.0
    %235 = vmatprep.subr.mxu0 0.0
    %236 = vmatpush1.msra.mxu0 0.0
    %237 = vmatprep.subr.mxu0 0.0
    %238 = vmatpush1.msra.mxu0 0.0
    %239 = vmatprep.subr.mxu0 0.0
    %240 = vmatpush1.msra.mxu0 0.0
    %241 = vmatprep.subr.mxu0 0.0
    %242 = vmatpush1.msra.mxu0 0.0
    %243 = vmatprep.subr.mxu0 0.0
    %244 = vmatpush1.msra.mxu0 0.0
    %245 = vmatprep.subr.mxu0 0.0
    %246 = vmatpush1.msra.mxu0 0.0
    %247 = vmatprep.subr.mxu0 0.0
    %248 = vmatpush1.msra.mxu0 0.0
    %249 = vmatprep.subr.mxu0 0.0
    %250 = vmatpush1.msra.mxu0 0.0
    %251 = vmatprep.subr.mxu0 0.0
    %252 = vmatpush1.msra.mxu0 0.0
    %253 = vmatprep.mubr.f32.mxu0 0.0
    %v254 = vand.u32 %v137, 4294901760
    %v255 = vsub.f32 %v137, %v254
    %v256 = vand.u32 %v255, 4294901760
    %v257 = vsub.f32 %v255, %v256
    %v258 = vand.u32 %v257, 4294901760
    %259 = vmatmul.mubr.f32.gmra.mrb[0].mxu0 %v258
    %v260 = vpop.f32.mrb[0].mxu0
    %v261 = vadd.f32 %v58, %v260
    %v262 = vpop.f32.mrb[0].mxu0
    %263 = vmatprep.mubr.f32.mxu0 0.0
    %v264 = vand.u32 %v140, 4294901760
    %v265 = vsub.f32 %v140, %v264
    %v266 = vand.u32 %v265, 4294901760
    %v267 = vsub.f32 %v265, %v266
    %v268 = vand.u32 %v267, 4294901760
    %269 = vmatmul.mubr.f32.gmra.mrb[0].mxu0 %v268
    %v270 = vpop.f32.mrb[0].mxu0
    %v271 = vadd.f32 %v63, %v270
    %v272 = vpop.f32.mrb[0].mxu0
    %273 = vmatprep.mubr.f32.mxu0 0.0
    %v274 = vand.u32 %v143, 4294901760
    %v275 = vsub.f32 %v143, %v274
    %v276 = vand.u32 %v275, 4294901760
    %v277 = vsub.f32 %v275, %v276
    %v278 = vand.u32 %v277, 4294901760
    %279 = vmatmul.mubr.f32.gmra.mrb[0].mxu0 %v278
    %v280 = vpop.f32.mrb[0].mxu0
    %v281 = vadd.f32 %v68, %v280
    %v282 = vpop.f32.mrb[0].mxu0
    %283 = vmatprep.mubr.f32.mxu0 0.0
    %v284 = vand.u32 %v146, 4294901760
    %v285 = vsub.f32 %v146, %v284
    %v286 = vand.u32 %v285, 4294901760
    %v287 = vsub.f32 %v285, %v286
    %v288 = vand.u32 %v287, 4294901760
    %289 = vmatmul.mubr.f32.gmra.mrb[0].mxu0 %v288
    %v290 = vpop.f32.mrb[0].mxu0
    %v291 = vadd.f32 %v73, %v290
    %v292 = vpop.f32.mrb[0].mxu0
    %293 = vmatprep.mubr.f32.mxu0 0.0
    %v294 = vand.u32 %v149, 4294901760
    %v295 = vsub.f32 %v149, %v294
    %v296 = vand.u32 %v295, 4294901760
    %v297 = vsub.f32 %v295, %v296
    %v298 = vand.u32 %v297, 4294901760
    %299 = vmatmul.mubr.f32.gmra.mrb[0].mxu0 %v298
    %v300 = vpop.f32.mrb[0].mxu0
    %v301 = vadd.f32 %v78, %v300
    %v302 = vpop.f32.mrb[0].mxu0
    %303 = vmatprep.mubr.f32.mxu0 0.0
    %v304 = vand.u32 %v152, 4294901760
    %v305 = vsub.f32 %v152, %v304
    %v306 = vand.u32 %v305, 4294901760
    %v307 = vsub.f32 %v305, %v306
    %v308 = vand.u32 %v307, 4294901760
    %309 = vmatmul.mubr.f32.gmra.mrb[0].mxu0 %v308
    %v310 = vpop.f32.mrb[0].mxu0
    %v311 = vadd.f32 %v83, %v310
    %v312 = vpop.f32.mrb[0].mxu0
    %313 = vmatprep.mubr.f32.mxu0 0.0
    %v314 = vand.u32 %v155, 4294901760
    %v315 = vsub.f32 %v155, %v314
    %v316 = vand.u32 %v315, 4294901760
    %v317 = vsub.f32 %v315, %v316
    %v318 = vand.u32 %v317, 4294901760
    %319 = vmatmul.mubr.f32.gmra.mrb[0].mxu0 %v318
    %v320 = vpop.f32.mrb[0].mxu0
    %v321 = vadd.f32 %v88, %v320
    %v322 = vpop.f32.mrb[0].mxu0
    %323 = vmatprep.mubr.f32.mxu0 0.0
    %v324 = vand.u32 %v158, 4294901760
    %v325 = vsub.f32 %v158, %v324
    %v326 = vand.u32 %v325, 4294901760
    %v327 = vsub.f32 %v325, %v326
    %v328 = vand.u32 %v327, 4294901760
    %329 = vmatmul.mubr.f32.gmra.mrb[0].mxu0 %v328
    %v330 = vpop.f32.mrb[0].mxu0
    %v331 = vadd.f32 %v93, %v330
    %v332 = vpop.f32.mrb[0].mxu0
    %333 = vmatprep.mubr.f32.mxu0 0.0
    %v334 = vand.u32 %v161, 4294901760
    %v335 = vsub.f32 %v161, %v334
    %v336 = vand.u32 %v335, 4294901760
    %v337 = vsub.f32 %v335, %v336
    %v338 = vand.u32 %v337, 4294901760
    %339 = vmatmul.mubr.f32.gmra.mrb[0].mxu0 %v338
    %v340 = vpop.f32.mrb[0].mxu0
    %v341 = vadd.f32 %v98, %v340
    %v342 = vpop.f32.mrb[0].mxu0
    %343 = vmatprep.mubr.f32.mxu0 0.0
    %v344 = vand.u32 %v164, 4294901760
    %v345 = vsub.f32 %v164, %v344
    %v346 = vand.u32 %v345, 4294901760
    %v347 = vsub.f32 %v345, %v346
    %v348 = vand.u32 %v347, 4294901760
    %349 = vmatmul.mubr.f32.gmra.mrb[0].mxu0 %v348
    %v350 = vpop.f32.mrb[0].mxu0
    %v351 = vadd.f32 %v103, %v350
    %v352 = vpop.f32.mrb[0].mxu0
    %353 = vmatprep.mubr.f32.mxu0 0.0
    %v354 = vand.u32 %v167, 4294901760
    %v355 = vsub.f32 %v167, %v354
    %v356 = vand.u32 %v355, 4294901760
    %v357 = vsub.f32 %v355, %v356
    %v358 = vand.u32 %v357, 4294901760
    %359 = vmatmul.mubr.f32.gmra.mrb[0].mxu0 %v358
    %v360 = vpop.f32.mrb[0].mxu0
    %v361 = vadd.f32 %v108, %v360
    %v362 = vpop.f32.mrb[0].mxu0
    %363 = vmatprep.mubr.f32.mxu0 0.0
    %v364 = vand.u32 %v170, 4294901760
    %v365 = vsub.f32 %v170, %v364
    %v366 = vand.u32 %v365, 4294901760
    %v367 = vsub.f32 %v365, %v366
    %v368 = vand.u32 %v367, 4294901760
    %369 = vmatmul.mubr.f32.gmra.mrb[0].mxu0 %v368
    %v370 = vpop.f32.mrb[0].mxu0
    %v371 = vadd.f32 %v113, %v370
    %v372 = vpop.f32.mrb[0].mxu0
    %373 = vmatprep.mubr.f32.mxu0 0.0
    %v374 = vand.u32 %v173, 4294901760
    %v375 = vsub.f32 %v173, %v374
    %v376 = vand.u32 %v375, 4294901760
    %v377 = vsub.f32 %v375, %v376
    %v378 = vand.u32 %v377, 4294901760
    %379 = vmatmul.mubr.f32.gmra.mrb[0].mxu0 %v378
    %v380 = vpop.f32.mrb[0].mxu0
    %v381 = vadd.f32 %v118, %v380
    %v382 = vpop.f32.mrb[0].mxu0
    %383 = vmatprep.mubr.f32.mxu0 0.0
    %v384 = vand.u32 %v176, 4294901760
    %v385 = vsub.f32 %v176, %v384
    %v386 = vand.u32 %v385, 4294901760
    %v387 = vsub.f32 %v385, %v386
    %v388 = vand.u32 %v387, 4294901760
    %389 = vmatmul.mubr.f32.gmra.mrb[0].mxu0 %v388
    %v390 = vpop.f32.mrb[0].mxu0
    %v391 = vadd.f32 %v123, %v390
    %v392 = vpop.f32.mrb[0].mxu0
    %393 = vmatprep.mubr.f32.mxu0 0.0
    %v394 = vand.u32 %v179, 4294901760
    %v395 = vsub.f32 %v179, %v394
    %v396 = vand.u32 %v395, 4294901760
    %v397 = vsub.f32 %v395, %v396
    %v398 = vand.u32 %v397, 4294901760
    %399 = vmatmul.mubr.f32.gmra.mrb[0].mxu0 %v398
    %v400 = vpop.f32.mrb[0].mxu0
    %v401 = vadd.f32 %v128, %v400
    %v402 = vpop.f32.mrb[0].mxu0
    %403 = vmatprep.mubr.f32.mxu0 0.0
    %v404 = vand.u32 %v182, 4294901760
    %v405 = vsub.f32 %v182, %v404
    %v406 = vand.u32 %v405, 4294901760
    %v407 = vsub.f32 %v405, %v406
    %v408 = vand.u32 %v407, 4294901760
    %409 = vmatmul.mubr.f32.gmra.mrb[0].mxu0 %v408
    %v410 = vpop.f32.mrb[0].mxu0
    %v411 = vadd.f32 %v133, %v410
    %v412 = vpop.f32.mrb[0].mxu0
    %413 = vdwg.mxu0
    %414 = vmatprep.subr.mxu0 0.0
    %v415 = vand.u32 %v186, 4294901760
    %v416 = vsub.f32 %v186, %v415
    %v417 = vand.u32 %v416, 4294901760
    %v418 = vsub.f32 %v416, %v417
    %v419 = vand.u32 %v418, 4294901760
    %420 = vmatpush1.msra.mxu0 %v419
    %421 = vmatprep.subr.mxu0 0.0
    %422 = vmatpush1.msra.mxu0 0.0
    %423 = vmatprep.subr.mxu0 0.0
    %424 = vmatpush1.msra.mxu0 0.0
    %425 = vmatprep.subr.mxu0 0.0
    %426 = vmatpush1.msra.mxu0 0.0
    %427 = vmatprep.subr.mxu0 0.0
    %428 = vmatpush1.msra.mxu0 0.0
    %429 = vmatprep.subr.mxu0 0.0
    %430 = vmatpush1.msra.mxu0 0.0
    %431 = vmatprep.subr.mxu0 0.0
    %432 = vmatpush1.msra.mxu0 0.0
    %433 = vmatprep.subr.mxu0 0.0
    %434 = vmatpush1.msra.mxu0 0.0
    %435 = vmatprep.subr.mxu0 0.0
    %436 = vmatpush1.msra.mxu0 0.0
    %437 = vmatprep.subr.mxu0 0.0
    %438 = vmatpush1.msra.mxu0 0.0
    %439 = vmatprep.subr.mxu0 0.0
    %440 = vmatpush1.msra.mxu0 0.0
    %441 = vmatprep.subr.mxu0 0.0
    %442 = vmatpush1.msra.mxu0 0.0
    %443 = vmatprep.subr.mxu0 0.0
    %444 = vmatpush1.msra.mxu0 0.0
    %445 = vmatprep.subr.mxu0 0.0
    %446 = vmatpush1.msra.mxu0 0.0
    %447 = vmatprep.subr.mxu0 0.0
    %448 = vmatpush1.msra.mxu0 0.0
    %449 = vmatprep.subr.mxu0 0.0
    %450 = vmatpush1.msra.mxu0 0.0
    %451 = vmatprep.subr.mxu0 0.0
    %452 = vmatpush1.msra.mxu0 0.0
    %453 = vmatprep.subr.mxu0 0.0
    %454 = vmatpush1.msra.mxu0 0.0
    %455 = vmatprep.subr.mxu0 0.0
    %456 = vmatpush1.msra.mxu0 0.0
    %457 = vmatprep.subr.mxu0 0.0
    %458 = vmatpush1.msra.mxu0 0.0
    %459 = vmatprep.subr.mxu0 0.0
    %460 = vmatpush1.msra.mxu0 0.0
    %461 = vmatprep.subr.mxu0 0.0
    %462 = vmatpush1.msra.mxu0 0.0
    %463 = vmatprep.subr.mxu0 0.0
    %464 = vmatpush1.msra.mxu0 0.0
    %465 = vmatprep.subr.mxu0 0.0
    %466 = vmatpush1.msra.mxu0 0.0
    %467 = vmatprep.subr.mxu0 0.0
    %468 = vmatpush1.msra.mxu0 0.0
    %469 = vmatprep.subr.mxu0 0.0
    %470 = vmatpush1.msra.mxu0 0.0
    %471 = vmatprep.subr.mxu0 0.0
    %472 = vmatpush1.msra.mxu0 0.0
    %473 = vmatprep.subr.mxu0 0.0
    %474 = vmatpush1.msra.mxu0 0.0
    %475 = vmatprep.subr.mxu0 0.0
    %476 = vmatpush1.msra.mxu0 0.0
    %477 = vmatprep.subr.mxu0 0.0
    %478 = vmatpush1.msra.mxu0 0.0
    %479 = vmatprep.subr.mxu0 0.0
    %480 = vmatpush1.msra.mxu0 0.0
    %481 = vmatprep.subr.mxu0 0.0
    %482 = vmatpush1.msra.mxu0 0.0
    %483 = vmatprep.mubr.f32.mxu0 0.0
    %v484 = vand.u32 %v137, 4294901760
    %485 = vmatmul.mubr.f32.gmra.mrb[0].mxu0 %v484
    %v486 = vpop.f32.mrb[0].mxu0
    %v487 = vadd.f32 %v261, %v486
    %v488 = vpop.f32.mrb[0].mxu0
    %489 = vmatprep.mubr.f32.mxu0 0.0
    %v490 = vand.u32 %v140, 4294901760
    %491 = vmatmul.mubr.f32.gmra.mrb[0].mxu0 %v490
    %v492 = vpop.f32.mrb[0].mxu0
    %v493 = vadd.f32 %v271, %v492
    %v494 = vpop.f32.mrb[0].mxu0
    %495 = vmatprep.mubr.f32.mxu0 0.0
    %v496 = vand.u32 %v143, 4294901760
    %497 = vmatmul.mubr.f32.gmra.mrb[0].mxu0 %v496
    %v498 = vpop.f32.mrb[0].mxu0
    %v499 = vadd.f32 %v281, %v498
    %v500 = vpop.f32.mrb[0].mxu0
    %501 = vmatprep.mubr.f32.mxu0 0.0
    %v502 = vand.u32 %v146, 4294901760
    %503 = vmatmul.mubr.f32.gmra.mrb[0].mxu0 %v502
    %v504 = vpop.f32.mrb[0].mxu0
    %v505 = vadd.f32 %v291, %v504
    %v506 = vpop.f32.mrb[0].mxu0
    %507 = vmatprep.mubr.f32.mxu0 0.0
    %v508 = vand.u32 %v149, 4294901760
    %509 = vmatmul.mubr.f32.gmra.mrb[0].mxu0 %v508
    %v510 = vpop.f32.mrb[0].mxu0
    %v511 = vadd.f32 %v301, %v510
    %v512 = vpop.f32.mrb[0].mxu0
    %513 = vmatprep.mubr.f32.mxu0 0.0
    %v514 = vand.u32 %v152, 4294901760
    %515 = vmatmul.mubr.f32.gmra.mrb[0].mxu0 %v514
    %v516 = vpop.f32.mrb[0].mxu0
    %v517 = vadd.f32 %v311, %v516
    %v518 = vpop.f32.mrb[0].mxu0
    %519 = vmatprep.mubr.f32.mxu0 0.0
    %v520 = vand.u32 %v155, 4294901760
    %521 = vmatmul.mubr.f32.gmra.mrb[0].mxu0 %v520
    %v522 = vpop.f32.mrb[0].mxu0
    %v523 = vadd.f32 %v321, %v522
    %v524 = vpop.f32.mrb[0].mxu0
    %525 = vmatprep.mubr.f32.mxu0 0.0
    %v526 = vand.u32 %v158, 4294901760
    %527 = vmatmul.mubr.f32.gmra.mrb[0].mxu0 %v526
    %v528 = vpop.f32.mrb[0].mxu0
    %v529 = vadd.f32 %v331, %v528
    %v530 = vpop.f32.mrb[0].mxu0
    %531 = vmatprep.mubr.f32.mxu0 0.0
    %v532 = vand.u32 %v161, 4294901760
    %533 = vmatmul.mubr.f32.gmra.mrb[0].mxu0 %v532
    %v534 = vpop.f32.mrb[0].mxu0
    %v535 = vadd.f32 %v341, %v534
    %v536 = vpop.f32.mrb[0].mxu0
    %537 = vmatprep.mubr.f32.mxu0 0.0
    %v538 = vand.u32 %v164, 4294901760
    %539 = vmatmul.mubr.f32.gmra.mrb[0].mxu0 %v538
    %v540 = vpop.f32.mrb[0].mxu0
    %v541 = vadd.f32 %v351, %v540
    %v542 = vpop.f32.mrb[0].mxu0
    %543 = vmatprep.mubr.f32.mxu0 0.0
    %v544 = vand.u32 %v167, 4294901760
    %545 = vmatmul.mubr.f32.gmra.mrb[0].mxu0 %v544
    %v546 = vpop.f32.mrb[0].mxu0
    %v547 = vadd.f32 %v361, %v546
    %v548 = vpop.f32.mrb[0].mxu0
    %549 = vmatprep.mubr.f32.mxu0 0.0
    %v550 = vand.u32 %v170, 4294901760
    %551 = vmatmul.mubr.f32.gmra.mrb[0].mxu0 %v550
    %v552 = vpop.f32.mrb[0].mxu0
    %v553 = vadd.f32 %v371, %v552
    %v554 = vpop.f32.mrb[0].mxu0
    %555 = vmatprep.mubr.f32.mxu0 0.0
    %v556 = vand.u32 %v173, 4294901760
    %557 = vmatmul.mubr.f32.gmra.mrb[0].mxu0 %v556
    %v558 = vpop.f32.mrb[0].mxu0
    %v559 = vadd.f32 %v381, %v558
    %v560 = vpop.f32.mrb[0].mxu0
    %561 = vmatprep.mubr.f32.mxu0 0.0
    %v562 = vand.u32 %v176, 4294901760
    %563 = vmatmul.mubr.f32.gmra.mrb[0].mxu0 %v562
    %v564 = vpop.f32.mrb[0].mxu0
    %v565 = vadd.f32 %v391, %v564
    %v566 = vpop.f32.mrb[0].mxu0
    %567 = vmatprep.mubr.f32.mxu0 0.0
    %v568 = vand.u32 %v179, 4294901760
    %569 = vmatmul.mubr.f32.gmra.mrb[0].mxu0 %v568
    %v570 = vpop.f32.mrb[0].mxu0
    %v571 = vadd.f32 %v401, %v570
    %v572 = vpop.f32.mrb[0].mxu0
    %573 = vmatprep.mubr.f32.mxu0 0.0
    %v574 = vand.u32 %v182, 4294901760
    %575 = vmatmul.mubr.f32.gmra.mrb[0].mxu0 %v574
    %v576 = vpop.f32.mrb[0].mxu0
    %v577 = vadd.f32 %v411, %v576
    %v578 = vpop.f32.mrb[0].mxu0
    %579 = vdwg.mxu0
    %580 = vmatprep.subr.mxu0 0.0
    %v581 = vand.u32 %v186, 4294901760
    %v582 = vsub.f32 %v186, %v581
    %583 = vmatpush1.msra.mxu0 %v582
    %584 = vmatprep.subr.mxu0 0.0
    %585 = vmatpush1.msra.mxu0 0.0
    %586 = vmatprep.subr.mxu0 0.0
    %587 = vmatpush1.msra.mxu0 0.0
    %588 = vmatprep.subr.mxu0 0.0
    %589 = vmatpush1.msra.mxu0 0.0
    %590 = vmatprep.subr.mxu0 0.0
    %591 = vmatpush1.msra.mxu0 0.0
    %592 = vmatprep.subr.mxu0 0.0
    %593 = vmatpush1.msra.mxu0 0.0
    %594 = vmatprep.subr.mxu0 0.0
    %595 = vmatpush1.msra.mxu0 0.0
    %596 = vmatprep.subr.mxu0 0.0
    %597 = vmatpush1.msra.mxu0 0.0
    %598 = vmatprep.subr.mxu0 0.0
    %599 = vmatpush1.msra.mxu0 0.0
    %600 = vmatprep.subr.mxu0 0.0
    %601 = vmatpush1.msra.mxu0 0.0
    %602 = vmatprep.subr.mxu0 0.0
    %603 = vmatpush1.msra.mxu0 0.0
    %604 = vmatprep.subr.mxu0 0.0
    %605 = vmatpush1.msra.mxu0 0.0
    %606 = vmatprep.subr.mxu0 0.0
    %607 = vmatpush1.msra.mxu0 0.0
    %608 = vmatprep.subr.mxu0 0.0
    %609 = vmatpush1.msra.mxu0 0.0
    %610 = vmatprep.subr.mxu0 0.0
    %611 = vmatpush1.msra.mxu0 0.0
    %612 = vmatprep.subr.mxu0 0.0
    %613 = vmatpush1.msra.mxu0 0.0
    %614 = vmatprep.subr.mxu0 0.0
    %615 = vmatpush1.msra.mxu0 0.0
    %616 = vmatprep.subr.mxu0 0.0
    %617 = vmatpush1.msra.mxu0 0.0
    %618 = vmatprep.subr.mxu0 0.0
    %619 = vmatpush1.msra.mxu0 0.0
    %620 = vmatprep.subr.mxu0 0.0
    %621 = vmatpush1.msra.mxu0 0.0
    %622 = vmatprep.subr.mxu0 0.0
    %623 = vmatpush1.msra.mxu0 0.0
    %624 = vmatprep.subr.mxu0 0.0
    %625 = vmatpush1.msra.mxu0 0.0
    %626 = vmatprep.subr.mxu0 0.0
    %627 = vmatpush1.msra.mxu0 0.0
    %628 = vmatprep.subr.mxu0 0.0
    %629 = vmatpush1.msra.mxu0 0.0
    %630 = vmatprep.subr.mxu0 0.0
    %631 = vmatpush1.msra.mxu0 0.0
    %632 = vmatprep.subr.mxu0 0.0
    %633 = vmatpush1.msra.mxu0 0.0
    %634 = vmatprep.subr.mxu0 0.0
    %635 = vmatpush1.msra.mxu0 0.0
    %636 = vmatprep.subr.mxu0 0.0
    %637 = vmatpush1.msra.mxu0 0.0
    %638 = vmatprep.subr.mxu0 0.0
    %639 = vmatpush1.msra.mxu0 0.0
    %640 = vmatprep.subr.mxu0 0.0
    %641 = vmatpush1.msra.mxu0 0.0
    %642 = vmatprep.subr.mxu0 0.0
    %643 = vmatpush1.msra.mxu0 0.0
    %644 = vmatprep.subr.mxu0 0.0
    %645 = vmatpush1.msra.mxu0 0.0
    %646 = vmatprep.mubr.f32.mxu0 0.0
    %v647 = vand.u32 %v137, 4294901760
    %v648 = vsub.f32 %v137, %v647
    %649 = vmatmul.mubr.f32.gmra.mrb[0].mxu0 %v648
    %v650 = vpop.f32.mrb[0].mxu0
    %v651 = vadd.f32 %v487, %v650
    %v652 = vpop.f32.mrb[0].mxu0
    %653 = vmatprep.mubr.f32.mxu0 0.0
    %v654 = vand.u32 %v140, 4294901760
    %v655 = vsub.f32 %v140, %v654
    %656 = vmatmul.mubr.f32.gmra.mrb[0].mxu0 %v655
    %v657 = vpop.f32.mrb[0].mxu0
    %v658 = vadd.f32 %v493, %v657
    %v659 = vpop.f32.mrb[0].mxu0
    %660 = vmatprep.mubr.f32.mxu0 0.0
    %v661 = vand.u32 %v143, 4294901760
    %v662 = vsub.f32 %v143, %v661
    %663 = vmatmul.mubr.f32.gmra.mrb[0].mxu0 %v662
    %v664 = vpop.f32.mrb[0].mxu0
    %v665 = vadd.f32 %v499, %v664
    %v666 = vpop.f32.mrb[0].mxu0
    %667 = vmatprep.mubr.f32.mxu0 0.0
    %v668 = vand.u32 %v146, 4294901760
    %v669 = vsub.f32 %v146, %v668
    %670 = vmatmul.mubr.f32.gmra.mrb[0].mxu0 %v669
    %v671 = vpop.f32.mrb[0].mxu0
    %v672 = vadd.f32 %v505, %v671
    %v673 = vpop.f32.mrb[0].mxu0
    %674 = vmatprep.mubr.f32.mxu0 0.0
    %v675 = vand.u32 %v149, 4294901760
    %v676 = vsub.f32 %v149, %v675
    %677 = vmatmul.mubr.f32.gmra.mrb[0].mxu0 %v676
    %v678 = vpop.f32.mrb[0].mxu0
    %v679 = vadd.f32 %v511, %v678
    %v680 = vpop.f32.mrb[0].mxu0
    %681 = vmatprep.mubr.f32.mxu0 0.0
    %v682 = vand.u32 %v152, 4294901760
    %v683 = vsub.f32 %v152, %v682
    %684 = vmatmul.mubr.f32.gmra.mrb[0].mxu0 %v683
    %v685 = vpop.f32.mrb[0].mxu0
    %v686 = vadd.f32 %v517, %v685
    %v687 = vpop.f32.mrb[0].mxu0
    %688 = vmatprep.mubr.f32.mxu0 0.0
    %v689 = vand.u32 %v155, 4294901760
    %v690 = vsub.f32 %v155, %v689
    %691 = vmatmul.mubr.f32.gmra.mrb[0].mxu0 %v690
    %v692 = vpop.f32.mrb[0].mxu0
    %v693 = vadd.f32 %v523, %v692
    %v694 = vpop.f32.mrb[0].mxu0
    %695 = vmatprep.mubr.f32.mxu0 0.0
    %v696 = vand.u32 %v158, 4294901760
    %v697 = vsub.f32 %v158, %v696
    %698 = vmatmul.mubr.f32.gmra.mrb[0].mxu0 %v697
    %v699 = vpop.f32.mrb[0].mxu0
    %v700 = vadd.f32 %v529, %v699
    %v701 = vpop.f32.mrb[0].mxu0
    %702 = vmatprep.mubr.f32.mxu0 0.0
    %v703 = vand.u32 %v161, 4294901760
    %v704 = vsub.f32 %v161, %v703
    %705 = vmatmul.mubr.f32.gmra.mrb[0].mxu0 %v704
    %v706 = vpop.f32.mrb[0].mxu0
    %v707 = vadd.f32 %v535, %v706
    %v708 = vpop.f32.mrb[0].mxu0
    %709 = vmatprep.mubr.f32.mxu0 0.0
    %v710 = vand.u32 %v164, 4294901760
    %v711 = vsub.f32 %v164, %v710
    %712 = vmatmul.mubr.f32.gmra.mrb[0].mxu0 %v711
    %v713 = vpop.f32.mrb[0].mxu0
    %v714 = vadd.f32 %v541, %v713
    %v715 = vpop.f32.mrb[0].mxu0
    %716 = vmatprep.mubr.f32.mxu0 0.0
    %v717 = vand.u32 %v167, 4294901760
    %v718 = vsub.f32 %v167, %v717
    %719 = vmatmul.mubr.f32.gmra.mrb[0].mxu0 %v718
    %v720 = vpop.f32.mrb[0].mxu0
    %v721 = vadd.f32 %v547, %v720
    %v722 = vpop.f32.mrb[0].mxu0
    %723 = vmatprep.mubr.f32.mxu0 0.0
    %v724 = vand.u32 %v170, 4294901760
    %v725 = vsub.f32 %v170, %v724
    %726 = vmatmul.mubr.f32.gmra.mrb[0].mxu0 %v725
    %v727 = vpop.f32.mrb[0].mxu0
    %v728 = vadd.f32 %v553, %v727
    %v729 = vpop.f32.mrb[0].mxu0
    %730 = vmatprep.mubr.f32.mxu0 0.0
    %v731 = vand.u32 %v173, 4294901760
    %v732 = vsub.f32 %v173, %v731
    %733 = vmatmul.mubr.f32.gmra.mrb[0].mxu0 %v732
    %v734 = vpop.f32.mrb[0].mxu0
    %v735 = vadd.f32 %v559, %v734
    %v736 = vpop.f32.mrb[0].mxu0
    %737 = vmatprep.mubr.f32.mxu0 0.0
    %v738 = vand.u32 %v176, 4294901760
    %v739 = vsub.f32 %v176, %v738
    %740 = vmatmul.mubr.f32.gmra.mrb[0].mxu0 %v739
    %v741 = vpop.f32.mrb[0].mxu0
    %v742 = vadd.f32 %v565, %v741
    %v743 = vpop.f32.mrb[0].mxu0
    %744 = vmatprep.mubr.f32.mxu0 0.0
    %v745 = vand.u32 %v179, 4294901760
    %v746 = vsub.f32 %v179, %v745
    %747 = vmatmul.mubr.f32.gmra.mrb[0].mxu0 %v746
    %v748 = vpop.f32.mrb[0].mxu0
    %v749 = vadd.f32 %v571, %v748
    %v750 = vpop.f32.mrb[0].mxu0
    %751 = vmatprep.mubr.f32.mxu0 0.0
    %v752 = vand.u32 %v182, 4294901760
    %v753 = vsub.f32 %v182, %v752
    %754 = vmatmul.mubr.f32.gmra.mrb[0].mxu0 %v753
    %v755 = vpop.f32.mrb[0].mxu0
    %v756 = vadd.f32 %v577, %v755
    %v757 = vpop.f32.mrb[0].mxu0
    %758 = vdwg.mxu0
    %759 = vmatprep.subr.mxu0 0.0
    %v760 = vand.u32 %v186, 4294901760
    %761 = vmatpush1.msra.mxu0 %v760
    %762 = vmatprep.subr.mxu0 0.0
    %763 = vmatpush1.msra.mxu0 0.0
    %764 = vmatprep.subr.mxu0 0.0
    %765 = vmatpush1.msra.mxu0 0.0
    %766 = vmatprep.subr.mxu0 0.0
    %767 = vmatpush1.msra.mxu0 0.0
    %768 = vmatprep.subr.mxu0 0.0
    %769 = vmatpush1.msra.mxu0 0.0
    %770 = vmatprep.subr.mxu0 0.0
    %771 = vmatpush1.msra.mxu0 0.0
    %772 = vmatprep.subr.mxu0 0.0
    %773 = vmatpush1.msra.mxu0 0.0
    %774 = vmatprep.subr.mxu0 0.0
    %775 = vmatpush1.msra.mxu0 0.0
    %776 = vmatprep.subr.mxu0 0.0
    %777 = vmatpush1.msra.mxu0 0.0
    %778 = vmatprep.subr.mxu0 0.0
    %779 = vmatpush1.msra.mxu0 0.0
    %780 = vmatprep.subr.mxu0 0.0
    %781 = vmatpush1.msra.mxu0 0.0
    %782 = vmatprep.subr.mxu0 0.0
    %783 = vmatpush1.msra.mxu0 0.0
    %784 = vmatprep.subr.mxu0 0.0
    %785 = vmatpush1.msra.mxu0 0.0
    %786 = vmatprep.subr.mxu0 0.0
    %787 = vmatpush1.msra.mxu0 0.0
    %788 = vmatprep.subr.mxu0 0.0
    %789 = vmatpush1.msra.mxu0 0.0
    %790 = vmatprep.subr.mxu0 0.0
    %791 = vmatpush1.msra.mxu0 0.0
    %792 = vmatprep.subr.mxu0 0.0
    %793 = vmatpush1.msra.mxu0 0.0
    %794 = vmatprep.subr.mxu0 0.0
    %795 = vmatpush1.msra.mxu0 0.0
    %796 = vmatprep.subr.mxu0 0.0
    %797 = vmatpush1.msra.mxu0 0.0
    %798 = vmatprep.subr.mxu0 0.0
    %799 = vmatpush1.msra.mxu0 0.0
    %800 = vmatprep.subr.mxu0 0.0
    %801 = vmatpush1.msra.mxu0 0.0
    %802 = vmatprep.subr.mxu0 0.0
    %803 = vmatpush1.msra.mxu0 0.0
    %804 = vmatprep.subr.mxu0 0.0
    %805 = vmatpush1.msra.mxu0 0.0
    %806 = vmatprep.subr.mxu0 0.0
    %807 = vmatpush1.msra.mxu0 0.0
    %808 = vmatprep.subr.mxu0 0.0
    %809 = vmatpush1.msra.mxu0 0.0
    %810 = vmatprep.subr.mxu0 0.0
    %811 = vmatpush1.msra.mxu0 0.0
    %812 = vmatprep.subr.mxu0 0.0
    %813 = vmatpush1.msra.mxu0 0.0
    %814 = vmatprep.subr.mxu0 0.0
    %815 = vmatpush1.msra.mxu0 0.0
    %816 = vmatprep.subr.mxu0 0.0
    %817 = vmatpush1.msra.mxu0 0.0
    %818 = vmatprep.subr.mxu0 0.0
    %819 = vmatpush1.msra.mxu0 0.0
    %820 = vmatprep.subr.mxu0 0.0
    %821 = vmatpush1.msra.mxu0 0.0
    %822 = vmatprep.subr.mxu0 0.0
    %823 = vmatpush1.msra.mxu0 0.0
    %824 = vmatprep.mubr.f32.mxu0 0.0
    %v825 = vand.u32 %v137, 4294901760
    %v826 = vsub.f32 %v137, %v825
    %v827 = vand.u32 %v826, 4294901760
    %828 = vmatmul.mubr.f32.gmra.mrb[0].mxu0 %v827
    %v829 = vpop.f32.mrb[0].mxu0
    %v830 = vadd.f32 %v651, %v829
    %v831 = vpop.f32.mrb[0].mxu0
    %832 = vmatprep.mubr.f32.mxu0 0.0
    %v833 = vand.u32 %v140, 4294901760
    %v834 = vsub.f32 %v140, %v833
    %v835 = vand.u32 %v834, 4294901760
    %836 = vmatmul.mubr.f32.gmra.mrb[0].mxu0 %v835
    %v837 = vpop.f32.mrb[0].mxu0
    %v838 = vadd.f32 %v658, %v837
    %v839 = vpop.f32.mrb[0].mxu0
    %840 = vmatprep.mubr.f32.mxu0 0.0
    %v841 = vand.u32 %v143, 4294901760
    %v842 = vsub.f32 %v143, %v841
    %v843 = vand.u32 %v842, 4294901760
    %844 = vmatmul.mubr.f32.gmra.mrb[0].mxu0 %v843
    %v845 = vpop.f32.mrb[0].mxu0
    %v846 = vadd.f32 %v665, %v845
    %v847 = vpop.f32.mrb[0].mxu0
    %848 = vmatprep.mubr.f32.mxu0 0.0
    %v849 = vand.u32 %v146, 4294901760
    %v850 = vsub.f32 %v146, %v849
    %v851 = vand.u32 %v850, 4294901760
    %852 = vmatmul.mubr.f32.gmra.mrb[0].mxu0 %v851
    %v853 = vpop.f32.mrb[0].mxu0
    %v854 = vadd.f32 %v672, %v853
    %v855 = vpop.f32.mrb[0].mxu0
    %856 = vmatprep.mubr.f32.mxu0 0.0
    %v857 = vand.u32 %v149, 4294901760
    %v858 = vsub.f32 %v149, %v857
    %v859 = vand.u32 %v858, 4294901760
    %860 = vmatmul.mubr.f32.gmra.mrb[0].mxu0 %v859
    %v861 = vpop.f32.mrb[0].mxu0
    %v862 = vadd.f32 %v679, %v861
    %v863 = vpop.f32.mrb[0].mxu0
    %864 = vmatprep.mubr.f32.mxu0 0.0
    %v865 = vand.u32 %v152, 4294901760
    %v866 = vsub.f32 %v152, %v865
    %v867 = vand.u32 %v866, 4294901760
    %868 = vmatmul.mubr.f32.gmra.mrb[0].mxu0 %v867
    %v869 = vpop.f32.mrb[0].mxu0
    %v870 = vadd.f32 %v686, %v869
    %v871 = vpop.f32.mrb[0].mxu0
    %872 = vmatprep.mubr.f32.mxu0 0.0
    %v873 = vand.u32 %v155, 4294901760
    %v874 = vsub.f32 %v155, %v873
    %v875 = vand.u32 %v874, 4294901760
    %876 = vmatmul.mubr.f32.gmra.mrb[0].mxu0 %v875
    %v877 = vpop.f32.mrb[0].mxu0
    %v878 = vadd.f32 %v693, %v877
    %v879 = vpop.f32.mrb[0].mxu0
    %880 = vmatprep.mubr.f32.mxu0 0.0
    %v881 = vand.u32 %v158, 4294901760
    %v882 = vsub.f32 %v158, %v881
    %v883 = vand.u32 %v882, 4294901760
    %884 = vmatmul.mubr.f32.gmra.mrb[0].mxu0 %v883
    %v885 = vpop.f32.mrb[0].mxu0
    %v886 = vadd.f32 %v700, %v885
    %v887 = vpop.f32.mrb[0].mxu0
    %888 = vmatprep.mubr.f32.mxu0 0.0
    %v889 = vand.u32 %v161, 4294901760
    %v890 = vsub.f32 %v161, %v889
    %v891 = vand.u32 %v890, 4294901760
    %892 = vmatmul.mubr.f32.gmra.mrb[0].mxu0 %v891
    %v893 = vpop.f32.mrb[0].mxu0
    %v894 = vadd.f32 %v707, %v893
    %v895 = vpop.f32.mrb[0].mxu0
    %896 = vmatprep.mubr.f32.mxu0 0.0
    %v897 = vand.u32 %v164, 4294901760
    %v898 = vsub.f32 %v164, %v897
    %v899 = vand.u32 %v898, 4294901760
    %900 = vmatmul.mubr.f32.gmra.mrb[0].mxu0 %v899
    %v901 = vpop.f32.mrb[0].mxu0
    %v902 = vadd.f32 %v714, %v901
    %v903 = vpop.f32.mrb[0].mxu0
    %904 = vmatprep.mubr.f32.mxu0 0.0
    %v905 = vand.u32 %v167, 4294901760
    %v906 = vsub.f32 %v167, %v905
    %v907 = vand.u32 %v906, 4294901760
    %908 = vmatmul.mubr.f32.gmra.mrb[0].mxu0 %v907
    %v909 = vpop.f32.mrb[0].mxu0
    %v910 = vadd.f32 %v721, %v909
    %v911 = vpop.f32.mrb[0].mxu0
    %912 = vmatprep.mubr.f32.mxu0 0.0
    %v913 = vand.u32 %v170, 4294901760
    %v914 = vsub.f32 %v170, %v913
    %v915 = vand.u32 %v914, 4294901760
    %916 = vmatmul.mubr.f32.gmra.mrb[0].mxu0 %v915
    %v917 = vpop.f32.mrb[0].mxu0
    %v918 = vadd.f32 %v728, %v917
    %v919 = vpop.f32.mrb[0].mxu0
    %920 = vmatprep.mubr.f32.mxu0 0.0
    %v921 = vand.u32 %v173, 4294901760
    %v922 = vsub.f32 %v173, %v921
    %v923 = vand.u32 %v922, 4294901760
    %924 = vmatmul.mubr.f32.gmra.mrb[0].mxu0 %v923
    %v925 = vpop.f32.mrb[0].mxu0
    %v926 = vadd.f32 %v735, %v925
    %v927 = vpop.f32.mrb[0].mxu0
    %928 = vmatprep.mubr.f32.mxu0 0.0
    %v929 = vand.u32 %v176, 4294901760
    %v930 = vsub.f32 %v176, %v929
    %v931 = vand.u32 %v930, 4294901760
    %932 = vmatmul.mubr.f32.gmra.mrb[0].mxu0 %v931
    %v933 = vpop.f32.mrb[0].mxu0
    %v934 = vadd.f32 %v742, %v933
    %v935 = vpop.f32.mrb[0].mxu0
    %936 = vmatprep.mubr.f32.mxu0 0.0
    %v937 = vand.u32 %v179, 4294901760
    %v938 = vsub.f32 %v179, %v937
    %v939 = vand.u32 %v938, 4294901760
    %940 = vmatmul.mubr.f32.gmra.mrb[0].mxu0 %v939
    %v941 = vpop.f32.mrb[0].mxu0
    %v942 = vadd.f32 %v749, %v941
    %v943 = vpop.f32.mrb[0].mxu0
    %944 = vmatprep.mubr.f32.mxu0 0.0
    %v945 = vand.u32 %v182, 4294901760
    %v946 = vsub.f32 %v182, %v945
    %v947 = vand.u32 %v946, 4294901760
    %948 = vmatmul.mubr.f32.gmra.mrb[0].mxu0 %v947
    %v949 = vpop.f32.mrb[0].mxu0
    %v950 = vadd.f32 %v756, %v949
    %v951 = vpop.f32.mrb[0].mxu0
    %952 = vdwg.mxu0
    %953 = vmatprep.subr.mxu0 0.0
    %v954 = vand.u32 %v186, 4294901760
    %v955 = vsub.f32 %v186, %v954
    %v956 = vand.u32 %v955, 4294901760
    %957 = vmatpush1.msra.mxu0 %v956
    %958 = vmatprep.subr.mxu0 0.0
    %959 = vmatpush1.msra.mxu0 0.0
    %960 = vmatprep.subr.mxu0 0.0
    %961 = vmatpush1.msra.mxu0 0.0
    %962 = vmatprep.subr.mxu0 0.0
    %963 = vmatpush1.msra.mxu0 0.0
    %964 = vmatprep.subr.mxu0 0.0
    %965 = vmatpush1.msra.mxu0 0.0
    %966 = vmatprep.subr.mxu0 0.0
    %967 = vmatpush1.msra.mxu0 0.0
    %968 = vmatprep.subr.mxu0 0.0
    %969 = vmatpush1.msra.mxu0 0.0
    %970 = vmatprep.subr.mxu0 0.0
    %971 = vmatpush1.msra.mxu0 0.0
    %972 = vmatprep.subr.mxu0 0.0
    %973 = vmatpush1.msra.mxu0 0.0
    %974 = vmatprep.subr.mxu0 0.0
    %975 = vmatpush1.msra.mxu0 0.0
    %976 = vmatprep.subr.mxu0 0.0
    %977 = vmatpush1.msra.mxu0 0.0
    %978 = vmatprep.subr.mxu0 0.0
    %979 = vmatpush1.msra.mxu0 0.0
    %980 = vmatprep.subr.mxu0 0.0
    %981 = vmatpush1.msra.mxu0 0.0
    %982 = vmatprep.subr.mxu0 0.0
    %983 = vmatpush1.msra.mxu0 0.0
    %984 = vmatprep.subr.mxu0 0.0
    %985 = vmatpush1.msra.mxu0 0.0
    %986 = vmatprep.subr.mxu0 0.0
    %987 = vmatpush1.msra.mxu0 0.0
    %988 = vmatprep.subr.mxu0 0.0
    %989 = vmatpush1.msra.mxu0 0.0
    %990 = vmatprep.subr.mxu0 0.0
    %991 = vmatpush1.msra.mxu0 0.0
    %992 = vmatprep.subr.mxu0 0.0
    %993 = vmatpush1.msra.mxu0 0.0
    %994 = vmatprep.subr.mxu0 0.0
    %995 = vmatpush1.msra.mxu0 0.0
    %996 = vmatprep.subr.mxu0 0.0
    %997 = vmatpush1.msra.mxu0 0.0
    %998 = vmatprep.subr.mxu0 0.0
    %999 = vmatpush1.msra.mxu0 0.0
    %1000 = vmatprep.subr.mxu0 0.0
    %1001 = vmatpush1.msra.mxu0 0.0
    %1002 = vmatprep.subr.mxu0 0.0
    %1003 = vmatpush1.msra.mxu0 0.0
    %1004 = vmatprep.subr.mxu0 0.0
    %1005 = vmatpush1.msra.mxu0 0.0
    %1006 = vmatprep.subr.mxu0 0.0
    %1007 = vmatpush1.msra.mxu0 0.0
    %1008 = vmatprep.subr.mxu0 0.0
    %1009 = vmatpush1.msra.mxu0 0.0
    %1010 = vmatprep.subr.mxu0 0.0
    %1011 = vmatpush1.msra.mxu0 0.0
    %1012 = vmatprep.subr.mxu0 0.0
    %1013 = vmatpush1.msra.mxu0 0.0
    %1014 = vmatprep.subr.mxu0 0.0
    %1015 = vmatpush1.msra.mxu0 0.0
    %1016 = vmatprep.subr.mxu0 0.0
    %1017 = vmatpush1.msra.mxu0 0.0
    %1018 = vmatprep.subr.mxu0 0.0
    %1019 = vmatpush1.msra.mxu0 0.0
    %1020 = vmatprep.mubr.f32.mxu0 0.0
    %v1021 = vand.u32 %v137, 4294901760
    %1022 = vmatmul.mubr.f32.gmra.mrb[0].mxu0 %v1021
    %v1023 = vpop.f32.mrb[0].mxu0
    %v1024 = vadd.f32 %v830, %v1023
    %v1025 = vpop.f32.mrb[0].mxu0
    %1026 = vmatprep.mubr.f32.mxu0 0.0
    %v1027 = vand.u32 %v140, 4294901760
    %1028 = vmatmul.mubr.f32.gmra.mrb[0].mxu0 %v1027
    %v1029 = vpop.f32.mrb[0].mxu0
    %v1030 = vadd.f32 %v838, %v1029
    %v1031 = vpop.f32.mrb[0].mxu0
    %1032 = vmatprep.mubr.f32.mxu0 0.0
    %v1033 = vand.u32 %v143, 4294901760
    %1034 = vmatmul.mubr.f32.gmra.mrb[0].mxu0 %v1033
    %v1035 = vpop.f32.mrb[0].mxu0
    %v1036 = vadd.f32 %v846, %v1035
    %v1037 = vpop.f32.mrb[0].mxu0
    %1038 = vmatprep.mubr.f32.mxu0 0.0
    %v1039 = vand.u32 %v146, 4294901760
    %1040 = vmatmul.mubr.f32.gmra.mrb[0].mxu0 %v1039
    %v1041 = vpop.f32.mrb[0].mxu0
    %v1042 = vadd.f32 %v854, %v1041
    %v1043 = vpop.f32.mrb[0].mxu0
    %1044 = vmatprep.mubr.f32.mxu0 0.0
    %v1045 = vand.u32 %v149, 4294901760
    %1046 = vmatmul.mubr.f32.gmra.mrb[0].mxu0 %v1045
    %v1047 = vpop.f32.mrb[0].mxu0
    %v1048 = vadd.f32 %v862, %v1047
    %v1049 = vpop.f32.mrb[0].mxu0
    %1050 = vmatprep.mubr.f32.mxu0 0.0
    %v1051 = vand.u32 %v152, 4294901760
    %1052 = vmatmul.mubr.f32.gmra.mrb[0].mxu0 %v1051
    %v1053 = vpop.f32.mrb[0].mxu0
    %v1054 = vadd.f32 %v870, %v1053
    %v1055 = vpop.f32.mrb[0].mxu0
    %1056 = vmatprep.mubr.f32.mxu0 0.0
    %v1057 = vand.u32 %v155, 4294901760
    %1058 = vmatmul.mubr.f32.gmra.mrb[0].mxu0 %v1057
    %v1059 = vpop.f32.mrb[0].mxu0
    %v1060 = vadd.f32 %v878, %v1059
    %v1061 = vpop.f32.mrb[0].mxu0
    %1062 = vmatprep.mubr.f32.mxu0 0.0
    %v1063 = vand.u32 %v158, 4294901760
    %1064 = vmatmul.mubr.f32.gmra.mrb[0].mxu0 %v1063
    %v1065 = vpop.f32.mrb[0].mxu0
    %v1066 = vadd.f32 %v886, %v1065
    %v1067 = vpop.f32.mrb[0].mxu0
    %1068 = vmatprep.mubr.f32.mxu0 0.0
    %v1069 = vand.u32 %v161, 4294901760
    %1070 = vmatmul.mubr.f32.gmra.mrb[0].mxu0 %v1069
    %v1071 = vpop.f32.mrb[0].mxu0
    %v1072 = vadd.f32 %v894, %v1071
    %v1073 = vpop.f32.mrb[0].mxu0
    %1074 = vmatprep.mubr.f32.mxu0 0.0
    %v1075 = vand.u32 %v164, 4294901760
    %1076 = vmatmul.mubr.f32.gmra.mrb[0].mxu0 %v1075
    %v1077 = vpop.f32.mrb[0].mxu0
    %v1078 = vadd.f32 %v902, %v1077
    %v1079 = vpop.f32.mrb[0].mxu0
    %1080 = vmatprep.mubr.f32.mxu0 0.0
    %v1081 = vand.u32 %v167, 4294901760
    %1082 = vmatmul.mubr.f32.gmra.mrb[0].mxu0 %v1081
    %v1083 = vpop.f32.mrb[0].mxu0
    %v1084 = vadd.f32 %v910, %v1083
    %v1085 = vpop.f32.mrb[0].mxu0
    %1086 = vmatprep.mubr.f32.mxu0 0.0
    %v1087 = vand.u32 %v170, 4294901760
    %1088 = vmatmul.mubr.f32.gmra.mrb[0].mxu0 %v1087
    %v1089 = vpop.f32.mrb[0].mxu0
    %v1090 = vadd.f32 %v918, %v1089
    %v1091 = vpop.f32.mrb[0].mxu0
    %1092 = vmatprep.mubr.f32.mxu0 0.0
    %v1093 = vand.u32 %v173, 4294901760
    %1094 = vmatmul.mubr.f32.gmra.mrb[0].mxu0 %v1093
    %v1095 = vpop.f32.mrb[0].mxu0
    %v1096 = vadd.f32 %v926, %v1095
    %v1097 = vpop.f32.mrb[0].mxu0
    %1098 = vmatprep.mubr.f32.mxu0 0.0
    %v1099 = vand.u32 %v176, 4294901760
    %1100 = vmatmul.mubr.f32.gmra.mrb[0].mxu0 %v1099
    %v1101 = vpop.f32.mrb[0].mxu0
    %v1102 = vadd.f32 %v934, %v1101
    %v1103 = vpop.f32.mrb[0].mxu0
    %1104 = vmatprep.mubr.f32.mxu0 0.0
    %v1105 = vand.u32 %v179, 4294901760
    %1106 = vmatmul.mubr.f32.gmra.mrb[0].mxu0 %v1105
    %v1107 = vpop.f32.mrb[0].mxu0
    %v1108 = vadd.f32 %v942, %v1107
    %v1109 = vpop.f32.mrb[0].mxu0
    %1110 = vmatprep.mubr.f32.mxu0 0.0
    %v1111 = vand.u32 %v182, 4294901760
    %1112 = vmatmul.mubr.f32.gmra.mrb[0].mxu0 %v1111
    %v1113 = vpop.f32.mrb[0].mxu0
    %v1114 = vadd.f32 %v950, %v1113
    %v1115 = vpop.f32.mrb[0].mxu0
    %1116 = vdwg.mxu0
    %1117 = vmatprep.subr.mxu0 0.0
    %v1118 = vand.u32 %v186, 4294901760
    %1119 = vmatpush1.msra.mxu0 %v1118
    %1120 = vmatprep.subr.mxu0 0.0
    %1121 = vmatpush1.msra.mxu0 0.0
    %1122 = vmatprep.subr.mxu0 0.0
    %1123 = vmatpush1.msra.mxu0 0.0
    %1124 = vmatprep.subr.mxu0 0.0
    %1125 = vmatpush1.msra.mxu0 0.0
    %1126 = vmatprep.subr.mxu0 0.0
    %1127 = vmatpush1.msra.mxu0 0.0
    %1128 = vmatprep.subr.mxu0 0.0
    %1129 = vmatpush1.msra.mxu0 0.0
    %1130 = vmatprep.subr.mxu0 0.0
    %1131 = vmatpush1.msra.mxu0 0.0
    %1132 = vmatprep.subr.mxu0 0.0
    %1133 = vmatpush1.msra.mxu0 0.0
    %1134 = vmatprep.subr.mxu0 0.0
    %1135 = vmatpush1.msra.mxu0 0.0
    %1136 = vmatprep.subr.mxu0 0.0
    %1137 = vmatpush1.msra.mxu0 0.0
    %1138 = vmatprep.subr.mxu0 0.0
    %1139 = vmatpush1.msra.mxu0 0.0
    %1140 = vmatprep.subr.mxu0 0.0
    %1141 = vmatpush1.msra.mxu0 0.0
    %1142 = vmatprep.subr.mxu0 0.0
    %1143 = vmatpush1.msra.mxu0 0.0
    %1144 = vmatprep.subr.mxu0 0.0
    %1145 = vmatpush1.msra.mxu0 0.0
    %1146 = vmatprep.subr.mxu0 0.0
    %1147 = vmatpush1.msra.mxu0 0.0
    %1148 = vmatprep.subr.mxu0 0.0
    %1149 = vmatpush1.msra.mxu0 0.0
    %1150 = vmatprep.subr.mxu0 0.0
    %1151 = vmatpush1.msra.mxu0 0.0
    %1152 = vmatprep.subr.mxu0 0.0
    %1153 = vmatpush1.msra.mxu0 0.0
    %1154 = vmatprep.subr.mxu0 0.0
    %1155 = vmatpush1.msra.mxu0 0.0
    %1156 = vmatprep.subr.mxu0 0.0
    %1157 = vmatpush1.msra.mxu0 0.0
    %1158 = vmatprep.subr.mxu0 0.0
    %1159 = vmatpush1.msra.mxu0 0.0
    %1160 = vmatprep.subr.mxu0 0.0
    %1161 = vmatpush1.msra.mxu0 0.0
    %1162 = vmatprep.subr.mxu0 0.0
    %1163 = vmatpush1.msra.mxu0 0.0
    %1164 = vmatprep.subr.mxu0 0.0
    %1165 = vmatpush1.msra.mxu0 0.0
    %1166 = vmatprep.subr.mxu0 0.0
    %1167 = vmatpush1.msra.mxu0 0.0
    %1168 = vmatprep.subr.mxu0 0.0
    %1169 = vmatpush1.msra.mxu0 0.0
    %1170 = vmatprep.subr.mxu0 0.0
    %1171 = vmatpush1.msra.mxu0 0.0
    %1172 = vmatprep.subr.mxu0 0.0
    %1173 = vmatpush1.msra.mxu0 0.0
    %1174 = vmatprep.subr.mxu0 0.0
    %1175 = vmatpush1.msra.mxu0 0.0
    %1176 = vmatprep.subr.mxu0 0.0
    %1177 = vmatpush1.msra.mxu0 0.0
    %1178 = vmatprep.subr.mxu0 0.0
    %1179 = vmatpush1.msra.mxu0 0.0
    %1180 = vmatprep.subr.mxu0 0.0
    %1181 = vmatpush1.msra.mxu0 0.0
    %1182 = vmatprep.mubr.f32.mxu0 0.0
    %v1183 = vand.u32 %v137, 4294901760
    %1184 = vmatmul.mubr.f32.gmra.mrb[0].mxu0 %v1183
    %v1185 = vpop.f32.mrb[0].mxu0
    %v1186 = vadd.f32 %v1024, %v1185
    %v1187 = vpop.f32.mrb[0].mxu0
    %1188 = vmatprep.mubr.f32.mxu0 0.0
    %v1189 = vand.u32 %v140, 4294901760
    %1190 = vmatmul.mubr.f32.gmra.mrb[0].mxu0 %v1189
    %v1191 = vpop.f32.mrb[0].mxu0
    %v1192 = vadd.f32 %v1030, %v1191
    %v1193 = vpop.f32.mrb[0].mxu0
    %1194 = vmatprep.mubr.f32.mxu0 0.0
    %v1195 = vand.u32 %v143, 4294901760
    %1196 = vmatmul.mubr.f32.gmra.mrb[0].mxu0 %v1195
    %v1197 = vpop.f32.mrb[0].mxu0
    %v1198 = vadd.f32 %v1036, %v1197
    %v1199 = vpop.f32.mrb[0].mxu0
    %1200 = vmatprep.mubr.f32.mxu0 0.0
    %v1201 = vand.u32 %v146, 4294901760
    %1202 = vmatmul.mubr.f32.gmra.mrb[0].mxu0 %v1201
    %v1203 = vpop.f32.mrb[0].mxu0
    %v1204 = vadd.f32 %v1042, %v1203
    %v1205 = vpop.f32.mrb[0].mxu0
    %1206 = vmatprep.mubr.f32.mxu0 0.0
    %v1207 = vand.u32 %v149, 4294901760
    %1208 = vmatmul.mubr.f32.gmra.mrb[0].mxu0 %v1207
    %v1209 = vpop.f32.mrb[0].mxu0
    %v1210 = vadd.f32 %v1048, %v1209
    %v1211 = vpop.f32.mrb[0].mxu0
    %1212 = vmatprep.mubr.f32.mxu0 0.0
    %v1213 = vand.u32 %v152, 4294901760
    %1214 = vmatmul.mubr.f32.gmra.mrb[0].mxu0 %v1213
    %v1215 = vpop.f32.mrb[0].mxu0
    %v1216 = vadd.f32 %v1054, %v1215
    %v1217 = vpop.f32.mrb[0].mxu0
    %1218 = vmatprep.mubr.f32.mxu0 0.0
    %v1219 = vand.u32 %v155, 4294901760
    %1220 = vmatmul.mubr.f32.gmra.mrb[0].mxu0 %v1219
    %v1221 = vpop.f32.mrb[0].mxu0
    %v1222 = vadd.f32 %v1060, %v1221
    %v1223 = vpop.f32.mrb[0].mxu0
    %1224 = vmatprep.mubr.f32.mxu0 0.0
    %v1225 = vand.u32 %v158, 4294901760
    %1226 = vmatmul.mubr.f32.gmra.mrb[0].mxu0 %v1225
    %v1227 = vpop.f32.mrb[0].mxu0
    %v1228 = vadd.f32 %v1066, %v1227
    %v1229 = vpop.f32.mrb[0].mxu0
    %1230 = vmatprep.mubr.f32.mxu0 0.0
    %v1231 = vand.u32 %v161, 4294901760
    %1232 = vmatmul.mubr.f32.gmra.mrb[0].mxu0 %v1231
    %v1233 = vpop.f32.mrb[0].mxu0
    %v1234 = vadd.f32 %v1072, %v1233
    %v1235 = vpop.f32.mrb[0].mxu0
    %1236 = vmatprep.mubr.f32.mxu0 0.0
    %v1237 = vand.u32 %v164, 4294901760
    %1238 = vmatmul.mubr.f32.gmra.mrb[0].mxu0 %v1237
    %v1239 = vpop.f32.mrb[0].mxu0
    %v1240 = vadd.f32 %v1078, %v1239
    %v1241 = vpop.f32.mrb[0].mxu0
    %1242 = vmatprep.mubr.f32.mxu0 0.0
    %v1243 = vand.u32 %v167, 4294901760
    %1244 = vmatmul.mubr.f32.gmra.mrb[0].mxu0 %v1243
    %v1245 = vpop.f32.mrb[0].mxu0
    %v1246 = vadd.f32 %v1084, %v1245
    %v1247 = vpop.f32.mrb[0].mxu0
    %1248 = vmatprep.mubr.f32.mxu0 0.0
    %v1249 = vand.u32 %v170, 4294901760
    %1250 = vmatmul.mubr.f32.gmra.mrb[0].mxu0 %v1249
    %v1251 = vpop.f32.mrb[0].mxu0
    %v1252 = vadd.f32 %v1090, %v1251
    %v1253 = vpop.f32.mrb[0].mxu0
    %1254 = vmatprep.mubr.f32.mxu0 0.0
    %v1255 = vand.u32 %v173, 4294901760
    %1256 = vmatmul.mubr.f32.gmra.mrb[0].mxu0 %v1255
    %v1257 = vpop.f32.mrb[0].mxu0
    %v1258 = vadd.f32 %v1096, %v1257
    %v1259 = vpop.f32.mrb[0].mxu0
    %1260 = vmatprep.mubr.f32.mxu0 0.0
    %v1261 = vand.u32 %v176, 4294901760
    %1262 = vmatmul.mubr.f32.gmra.mrb[0].mxu0 %v1261
    %v1263 = vpop.f32.mrb[0].mxu0
    %v1264 = vadd.f32 %v1102, %v1263
    %v1265 = vpop.f32.mrb[0].mxu0
    %1266 = vmatprep.mubr.f32.mxu0 0.0
    %v1267 = vand.u32 %v179, 4294901760
    %1268 = vmatmul.mubr.f32.gmra.mrb[0].mxu0 %v1267
    %v1269 = vpop.f32.mrb[0].mxu0
    %v1270 = vadd.f32 %v1108, %v1269
    %v1271 = vpop.f32.mrb[0].mxu0
    %1272 = vmatprep.mubr.f32.mxu0 0.0
    %v1273 = vand.u32 %v182, 4294901760
    %1274 = vmatmul.mubr.f32.gmra.mrb[0].mxu0 %v1273
    %v1275 = vpop.f32.mrb[0].mxu0
    %v1276 = vadd.f32 %v1114, %v1275
    %v1277 = vpop.f32.mrb[0].mxu0
    %1278 = vdwg.mxu0
    %v1279 = vmax.f32 %v1186, 0.0
    %v1280 = vmax.f32 %v1192, 0.0
    %v1281 = vmax.f32 %v1198, 0.0
    %v1282 = vmax.f32 %v1204, 0.0
    %v1283 = vmax.f32 %v1210, 0.0
    %v1284 = vmax.f32 %v1216, 0.0
    %v1285 = vmax.f32 %v1222, 0.0
    %v1286 = vmax.f32 %v1228, 0.0
    %v1287 = vmax.f32 %v1234, 0.0
    %v1288 = vmax.f32 %v1240, 0.0
    %v1289 = vmax.f32 %v1246, 0.0
    %v1290 = vmax.f32 %v1252, 0.0
    %v1291 = vmax.f32 %v1258, 0.0
    %v1292 = vmax.f32 %v1264, 0.0
    %v1293 = vmax.f32 %v1270, 0.0
    %v1294 = vmax.f32 %v1276, 0.0
    %v1295 = vld [vmem:[%s3] sm:$0xff]
    %v1296 = vld [vmem:[%s3 + $0x8] sm:$0xff]
    %v1297 = vld [vmem:[%s3 + $0x10] sm:$0xff]
    %v1298 = vld [vmem:[%s3 + $0x18] sm:$0xff]
    %v1299 = vld [vmem:[%s3 + $0x20] sm:$0xff]
    %v1300 = vld [vmem:[%s3 + $0x28] sm:$0xff]
    %v1301 = vld [vmem:[%s3 + $0x30] sm:$0xff]
    %v1302 = vld [vmem:[%s3 + $0x38] sm:$0xff]
    %v1303 = vld [vmem:[%s3 + $0x40] sm:$0xff]
    %v1304 = vld [vmem:[%s3 + $0x48] sm:$0xff]
    %v1305 = vld [vmem:[%s3 + $0x50] sm:$0xff]
    %v1306 = vld [vmem:[%s3 + $0x58] sm:$0xff]
    %v1307 = vld [vmem:[%s3 + $0x60] sm:$0xff]
    %v1308 = vld [vmem:[%s3 + $0x68] sm:$0xff]
    %v1309 = vld [vmem:[%s3 + $0x70] sm:$0xff]
    %v1310 = vld [vmem:[%s3 + $0x78] sm:$0xff]
    %1312 = vset.pattern.permute.xlu0 0
    %1313 = vperm.xlu0 %1312, %v1295
    %v1314 = vpop.permute.xlu0 %1313
    %1317 = vset.pattern.permute.xlu0 0
    %1318 = vperm.xlu0 %1317, %v1296
    %v1319 = vpop.permute.xlu0 %1318
    %1322 = vset.pattern.permute.xlu0 0
    %1323 = vperm.xlu0 %1322, %v1297
    %v1324 = vpop.permute.xlu0 %1323
    %1327 = vset.pattern.permute.xlu0 0
    %1328 = vperm.xlu0 %1327, %v1298
    %v1329 = vpop.permute.xlu0 %1328
    %1332 = vset.pattern.permute.xlu0 0
    %1333 = vperm.xlu0 %1332, %v1299
    %v1334 = vpop.permute.xlu0 %1333
    %1337 = vset.pattern.permute.xlu0 0
    %1338 = vperm.xlu0 %1337, %v1300
    %v1339 = vpop.permute.xlu0 %1338
    %1342 = vset.pattern.permute.xlu0 0
    %1343 = vperm.xlu0 %1342, %v1301
    %v1344 = vpop.permute.xlu0 %1343
    %1347 = vset.pattern.permute.xlu0 0
    %1348 = vperm.xlu0 %1347, %v1302
    %v1349 = vpop.permute.xlu0 %1348
    %1352 = vset.pattern.permute.xlu0 0
    %1353 = vperm.xlu0 %1352, %v1303
    %v1354 = vpop.permute.xlu0 %1353
    %1357 = vset.pattern.permute.xlu0 0
    %1358 = vperm.xlu0 %1357, %v1304
    %v1359 = vpop.permute.xlu0 %1358
    %1362 = vset.pattern.permute.xlu0 0
    %1363 = vperm.xlu0 %1362, %v1305
    %v1364 = vpop.permute.xlu0 %1363
    %1367 = vset.pattern.permute.xlu0 0
    %1368 = vperm.xlu0 %1367, %v1306
    %v1369 = vpop.permute.xlu0 %1368
    %1372 = vset.pattern.permute.xlu0 0
    %1373 = vperm.xlu0 %1372, %v1307
    %v1374 = vpop.permute.xlu0 %1373
    %1377 = vset.pattern.permute.xlu0 0
    %1378 = vperm.xlu0 %1377, %v1308
    %v1379 = vpop.permute.xlu0 %1378
    %1382 = vset.pattern.permute.xlu0 0
    %1383 = vperm.xlu0 %1382, %v1309
    %v1384 = vpop.permute.xlu0 %1383
    %1387 = vset.pattern.permute.xlu0 0
    %1388 = vperm.xlu0 %1387, %v1310
    %v1389 = vpop.permute.xlu0 %1388
    %v1391 = vmul.f32 %v1279, %v1314
    %v1392 = vmul.f32 %v1280, %v1319
    %v1393 = vmul.f32 %v1281, %v1324
    %v1394 = vmul.f32 %v1282, %v1329
    %v1395 = vmul.f32 %v1283, %v1334
    %v1396 = vmul.f32 %v1284, %v1339
    %v1397 = vmul.f32 %v1285, %v1344
    %v1398 = vmul.f32 %v1286, %v1349
    %v1399 = vmul.f32 %v1287, %v1354
    %v1400 = vmul.f32 %v1288, %v1359
    %v1401 = vmul.f32 %v1289, %v1364
    %v1402 = vmul.f32 %v1290, %v1369
    %v1403 = vmul.f32 %v1291, %v1374
    %v1404 = vmul.f32 %v1292, %v1379
    %v1405 = vmul.f32 %v1293, %v1384
    %v1406 = vmul.f32 %v1294, %v1389
    %v1407 = vadd.f32 %v1391, %v1392
    %v1408 = vadd.f32 %v1407, %v1393
    %v1409 = vadd.f32 %v1408, %v1394
    %v1410 = vadd.f32 %v1409, %v1395
    %v1411 = vadd.f32 %v1410, %v1396
    %v1412 = vadd.f32 %v1411, %v1397
    %v1413 = vadd.f32 %v1412, %v1398
    %v1414 = vadd.f32 %v1413, %v1399
    %v1415 = vadd.f32 %v1414, %v1400
    %v1416 = vadd.f32 %v1415, %v1401
    %v1417 = vadd.f32 %v1416, %v1402
    %v1418 = vadd.f32 %v1417, %v1403
    %v1419 = vadd.f32 %v1418, %v1404
    %v1420 = vadd.f32 %v1419, %v1405
    %v1421 = vadd.f32 %v1420, %v1406
    %v1422 = vrot.slane %v1421, 4
    %v1423 = vadd.f32 %v1421, %v1422
    %v1424 = vrot.slane %v1423, 2
    %v1425 = vadd.f32 %v1423, %v1424
    %v1426 = vrot.slane %v1425, 1
    %v1427 = vadd.f32 %v1425, %v1426
    %s1428 = sld [smem:[#allocation2]]
    %v1429 = vstv %s1428
    %v1430 = vadd.f32 %v1427, %v1429
    %1431 = vst [vmem:[#allocation3] sm:$0x1] %v1430
    // Predicated region
    $region22: #{tpu_custom_call.1} parent=1 // pred_check
      _
    $region23: #{tpu_custom_call.1} parent=1 // pred_check_branch
      %1433 = sbr.rel (0) target = $region25
    $region24: #{tpu_custom_call.1} parent=1 // pred_region
      %s1435 = ssub.s32 16, 16
      %1436 = vsyncadd [#allocation4], %s1435
      %s1438 = sshll.u32 [#allocation3], 4
      %s1439 = int_to_ptr.vmem [resolvable:$true] %s1438
      %1441 = dma.vmem_to_hbm [thread:$0]  %s1439, 16, %s5, [#allocation4]
    $region25: #{tpu_custom_call.1} parent=1 // pred_fallthru
      _
    // Predicated region
    $region26: #{tpu_custom_call.1} parent=1 // pred_check
      _
    $region27: #{tpu_custom_call.1} parent=1 // pred_check_branch
      %1443 = sbr.rel (0) target = $region29
    $region28: #{tpu_custom_call.1} parent=1 // pred_region
      %1444 = dma.done [#allocation4], 16
    $region29: #{tpu_custom_call.1} parent=1 // pred_fallthru
      _
    %1445 = vsyncpa [#allocation4], 1

</llo_original>
